<compile_context>
chip_gen: v5e
topology: v5e:2x2
jax: 0.10.0
libtpu: 0.0.40
codegen_flags: <defaults>
</compile_context>

<pallas_src>
import functools

import jax
import jax.numpy as jnp
from jax.experimental import pallas as pl
from jax.experimental.pallas import tpu as pltpu


def _round_up(x: int, m: int) -> int:
    return ((x + m - 1) // m) * m


def _activation(z, last: bool):
    if last:
        return jax.nn.sigmoid(z)            # nn.Sigmoid
    return jnp.where(z > 0, z, 0.2 * z)     # nn.LeakyReLU(0.2)


# ----------------------------- kernels -------------------------------------

def _conv_stats_kernel(patches_ref, w_ref, y_ref, sum_ref, sumsq_ref):
    """Conv tile as MXU matmul + per-tile BN partial statistics."""
    # [TN, K] bf16 @ [K, BC] bf16 -> [TN, BC] f32 accumulation.
    y = jnp.dot(patches_ref[...], w_ref[...], preferred_element_type=jnp.float32)
    y_ref[...] = y.astype(y_ref.dtype)      # raw conv result, bf16, re-read in pass 2
    # Keep 8 sublanes of partials: sum only across vreg groups (VPU adds, no
    # cross-sublane XLU reduce per tile); final reduce happens in JAX.
    yg = y.reshape(-1, 8, y.shape[-1])
    sum_ref[0] = jnp.sum(yg, axis=0)
    sumsq_ref[0] = jnp.sum(yg * yg, axis=0)


def _conv_act_kernel(patches_ref, w_ref, out_ref, *, last: bool):
    """batch_norm=False path: conv + activation fused, single pass."""
    y = jnp.dot(patches_ref[...], w_ref[...], preferred_element_type=jnp.float32)
    out_ref[...] = _activation(y, last).astype(out_ref.dtype)


def _bn_act_kernel(y_ref, scale_ref, shift_ref, out_ref, *, last: bool):
    """Pass 2: per-channel scale/shift + activation on the stored conv tiles."""
    z = y_ref[...].astype(jnp.float32) * scale_ref[...] + shift_ref[...]
    out_ref[...] = _activation(z, last).astype(out_ref.dtype)


# ----------------------------- wrapper --------------------------------------

def _im2col_nchw(x, kh, kw, stride, pad, dtype=jnp.bfloat16):
    """x: [B, C, H, W] -> patches [B*Ho*Wo, C*kh*kw] in `dtype` (bf16 MXU operand).

    Cast happens BEFORE the kh*kw expansion so the expanded matrix only ever
    exists once, at half the bytes of fp32.
    """
    B, C, H, W = x.shape
    x = x.astype(dtype)
    xp = jnp.pad(x, ((0, 0), (0, 0), (pad, pad), (pad, pad)))
    Ho = (H + 2 * pad - kh) // stride + 1
    Wo = (W + 2 * pad - kw) // stride + 1
    cols = []
    for di in range(kh):
        for dj in range(kw):
            cols.append(xp[:, :, di:di + stride * Ho:stride,
                              dj:dj + stride * Wo:stride])       # [B, C, Ho, Wo]
    patches = jnp.stack(cols, axis=2)                             # [B, C, kh*kw, Ho, Wo]
    patches = patches.reshape(B, C * kh * kw, Ho, Wo)             # (c, di, dj) flat order
    patches = patches.transpose(0, 2, 3, 1).reshape(B * Ho * Wo, C * kh * kw)
    return patches, Ho, Wo


def _choose_tile_n(n: int, k: int, bc: int, budget_bytes: int) -> int:
    """Pick the largest N-tile (multiple of 8, <=1024) fitting the VMEM budget.

    Budget covers the conv call's double-buffered bf16 patch + y tiles, the
    weight column block and the (tiny) stats blocks.  Sized so it also fits
    v7x's 64 MiB/TC VMEM.
    """
    fixed = 2 * k * bc * 2 + 4 * 2 * 8 * bc * 4      # weights + stats, dbl-buffered
    per_row = 2 * (k * 2 + bc * 2)                   # patch row + y row, dbl-buffered
    tn = max(8, (budget_bytes - fixed) // per_row)
    tn = min(tn, 1024, _round_up(n, 8))
    return max(8, (tn // 8) * 8)


def discriminator_block(x, weight, gamma, beta, *, stride, padding,
                        batch_norm=True, last=False, eps=1e-5,
                        out_dtype=jnp.float32, nchw_output=True,
                        vmem_budget_bytes=36 * 1024 * 1024):
    """x: [B, Cin, H, W] (NCHW), weight: [Cout, Cin, kh, kw].

    Returns NCHW `out_dtype` by default (matches the PyTorch module); a chained
    consumer can pass out_dtype=jnp.bfloat16, nchw_output=False to skip the
    final transpose and halve the writeback stream.
    """
    B, Cin, H, W = x.shape
    Cout, _, kh, kw = weight.shape

    patches, Ho, Wo = _im2col_nchw(x, kh, kw, stride, padding)    # [N, K] bf16
    N, K = patches.shape

    # Lane-dense output columns.  BC=256 fills the 256-wide MXU on v6e/v7x and
    # doubles patch-tile reuse (the compiler splits it into 2x128 on v5e).
    Cp = _round_up(Cout, 128)
    BC = 256 if Cp % 256 == 0 else 128
    n_cb = Cp // BC

    TN = _choose_tile_n(N, K, BC, vmem_budget_bytes)
    Np = _round_up(N, TN)
    n_tiles = Np // TN

    patches_p = jnp.pad(patches, ((0, Np - N), (0, 0)))           # bf16, padded rows = 0
    w_mat = jnp.pad(weight.reshape(Cout, Cin * kh * kw).T.astype(jnp.float32),
                    ((0, 0), (0, Cp - Cout))).astype(jnp.bfloat16)  # [K, Cp] bf16

    # grid = (N-tiles, channel-blocks); channel axis INNERMOST so the patch block
    # index (i, 0) is unchanged across it -> Pallas skips re-DMA of the patch tile.
    # Every grid point writes unique output blocks -> both axes "parallel"
    # (v7x megacore works even when n_cb == 1).
    patch_spec = pl.BlockSpec((TN, K), lambda i, c: (i, 0))
    w_spec = pl.BlockSpec((K, BC), lambda i, c: (0, c))
    tile_out_spec = pl.BlockSpec((TN, BC), lambda i, c: (i, c))

    cparams = pltpu.CompilerParams(
        dimension_semantics=("parallel", "parallel"),
        vmem_limit_bytes=48 * 1024 * 1024)

    if not batch_norm:
        # Single pass: conv + activation.
        out = pl.pallas_call(
            functools.partial(_conv_act_kernel, last=last),
            out_shape=jax.ShapeDtypeStruct((Np, Cp), out_dtype),
            grid_spec=pltpu.PrefetchScalarGridSpec(
                num_scalar_prefetch=0,
                grid=(n_tiles, n_cb),
                in_specs=[patch_spec, w_spec],
                out_specs=tile_out_spec),
            compiler_params=cparams,
        )(patches_p, w_mat)
    else:
        # Pass 1: conv once, store raw y (bf16) + per-tile BN partial stats.
        y, psum, psumsq = pl.pallas_call(
            _conv_stats_kernel,
            out_shape=(jax.ShapeDtypeStruct((Np, Cp), jnp.bfloat16),
                       jax.ShapeDtypeStruct((n_tiles, 8, Cp), jnp.float32),
                       jax.ShapeDtypeStruct((n_tiles, 8, Cp), jnp.float32)),
            grid_spec=pltpu.PrefetchScalarGridSpec(
                num_scalar_prefetch=0,
                grid=(n_tiles, n_cb),
                in_specs=[patch_spec, w_spec],
                out_specs=[tile_out_spec,
                           pl.BlockSpec((1, 8, BC), lambda i, c: (i, 0, c)),
                           pl.BlockSpec((1, 8, BC), lambda i, c: (i, 0, c))]),
            compiler_params=cparams,
        )(patches_p, w_mat)

        # Finalize batch statistics (tiny arrays) and fold gamma/beta into a
        # per-channel fused scale/shift.  Zero-padded rows contribute exactly 0
        # to both sums; we divide by the true N.
        # NOTE: var = E[y^2] - mean^2 in fp32 — fine for GAN discriminators; use
        # shifted/Welford sums if tighter BN accuracy is ever needed.
        inv_n = 1.0 / float(N)
        mean = jnp.sum(psum, axis=(0, 1)) * inv_n                  # (Cp,)
        var = jnp.maximum(jnp.sum(psumsq, axis=(0, 1)) * inv_n - mean * mean, 0.0)
        gamma_p = jnp.pad(gamma.astype(jnp.float32), (0, Cp - Cout))
        beta_p = jnp.pad(beta.astype(jnp.float32), (0, Cp - Cout))
        scale = gamma_p * jax.lax.rsqrt(var + eps)
        shift = beta_p - mean * scale
        scale = scale.reshape(1, Cp)
        shift = shift.reshape(1, Cp)

        # Pass 2: normalize + activation over the stored conv tiles (no patch
        # re-read, no second matmul).
        out = pl.pallas_call(
            functools.partial(_bn_act_kernel, last=last),
            out_shape=jax.ShapeDtypeStruct((Np, Cp), out_dtype),
            grid_spec=pltpu.PrefetchScalarGridSpec(
                num_scalar_prefetch=0,
                grid=(n_tiles, n_cb),
                in_specs=[tile_out_spec,
                          pl.BlockSpec((1, BC), lambda i, c: (0, c)),
                          pl.BlockSpec((1, BC), lambda i, c: (0, c))],
                out_specs=tile_out_spec),
            compiler_params=cparams,
        )(y, scale, shift)

    out = out[:N, :Cout].reshape(B, Ho, Wo, Cout)
    if nchw_output:
        out = out.transpose(0, 3, 1, 2)    # match the PyTorch module's NCHW output
    return out


# ----------------------------- reference & test -----------------------------

def _reference(x, weight, gamma, beta, *, stride, padding, batch_norm, last, eps=1e-5):
    y = jax.lax.conv_general_dilated(
        x.astype(jnp.float32), weight.astype(jnp.float32),
        window_strides=(stride, stride),
        padding=[(padding, padding), (padding, padding)],
        dimension_numbers=("NCHW", "OIHW", "NCHW"))
    if batch_norm:
        mean = jnp.mean(y, axis=(0, 2, 3), keepdims=True)
        var = jnp.mean((y - mean) ** 2, axis=(0, 2, 3), keepdims=True)
        y = (y - mean) * jax.lax.rsqrt(var + eps)
        y = y * gamma.reshape(1, -1, 1, 1) + beta.reshape(1, -1, 1, 1)
    return jax.nn.sigmoid(y) if last else jnp.where(y > 0, y, 0.2 * y)


if __name__ == "__main__":
    # DiscriminatorBlock(in_ch=4, out_ch=8, kernel_size=4, stride=2, padding=1,
    #                    batch_norm=True, last=False)
    B, Cin, H, W = 2, 4, 16, 16
    Cout, ksz, stride, padding = 8, 4, 2, 1

    key = jax.random.PRNGKey(0)
    kx, kw, kg, kb = jax.random.split(key, 4)
    x = jax.random.normal(kx, (B, Cin, H, W), dtype=jnp.float32)
    weight = 0.1 * jax.random.normal(kw, (Cout, Cin, ksz, ksz), dtype=jnp.float32)
    gamma = 1.0 + 0.05 * jax.random.normal(kg, (Cout,), dtype=jnp.float32)
    beta = 0.05 * jax.random.normal(kb, (Cout,), dtype=jnp.float32)

    # Main path: Conv -> BatchNorm -> LeakyReLU(0.2)  (whole block under one jit
    # so the im2col / stats-finalize glue fuses around the pallas_calls).
    main_fn = jax.jit(functools.partial(
        discriminator_block, stride=stride, padding=padding,
        batch_norm=True, last=False))
    out = jax.block_until_ready(main_fn(x, weight, gamma, beta))
    ref = _reference(x, weight, gamma, beta, stride=stride, padding=padding,
                     batch_norm=True, last=False)
    assert out.shape == (B, Cout, H // stride, W // stride)
    # bf16 MXU operands / bf16 intermediate y vs fp32 reference -> relaxed tolerance.
    assert jnp.allclose(out, ref, atol=5e-2, rtol=5e-2), \
        float(jnp.max(jnp.abs(out - ref)))

    # Last-layer path: Conv -> Identity -> Sigmoid (no BN, single fused pass)
    last_fn = jax.jit(functools.partial(
        discriminator_block, stride=stride, padding=padding,
        batch_norm=False, last=True))
    out2 = jax.block_until_ready(last_fn(x, weight, gamma, beta))
    ref2 = _reference(x, weight, gamma, beta, stride=stride, padding=padding,
                      batch_norm=False, last=True)
    assert jnp.allclose(out2, ref2, atol=5e-2, rtol=5e-2), \
        float(jnp.max(jnp.abs(out2 - ref2)))

    print("KERNEL_OK")
</pallas_src>

<mosaic_0001>
module attributes {stable_mosaic.version = 11 : i64} {
  func.func @_conv_stats_kernel(%arg0: i32, %arg1: i32, %arg2: memref<128x64xbf16, #tpu.memory_space<vmem>>, %arg3: memref<64x128xbf16, #tpu.memory_space<vmem>>, %arg4: memref<128x128xbf16, #tpu.memory_space<vmem>>, %arg5: memref<1x8x128xf32, #tpu.memory_space<vmem>>, %arg6: memref<1x8x128xf32, #tpu.memory_space<vmem>>) attributes {dimension_semantics = [#tpu.dimension_semantics<parallel>, #tpu.dimension_semantics<parallel>], iteration_bounds = array<i64: 1, 1>, scalar_prefetch = 0 : i64, scratch_operands = 0 : i64, tpu.core_type = #tpu.core_type<tc>, window_params = [{transform_indices = @transform_0, window_bounds = array<i64: 128, 64>}, {transform_indices = @transform_1, window_bounds = array<i64: 64, 128>}, {transform_indices = @transform_2, window_bounds = array<i64: 128, 128>}, {transform_indices = @transform_3, window_bounds = array<i64: 1, 8, 128>}, {transform_indices = @transform_4, window_bounds = array<i64: 1, 8, 128>}]} {
    %c0 = arith.constant 0 : index
    %c0_0 = arith.constant 0 : index
    %0 = vector.load %arg2[%c0, %c0_0] : memref<128x64xbf16, #tpu.memory_space<vmem>>, vector<128x64xbf16>
    %c0_1 = arith.constant 0 : index
    %c0_2 = arith.constant 0 : index
    %1 = vector.load %arg3[%c0_1, %c0_2] : memref<64x128xbf16, #tpu.memory_space<vmem>>, vector<64x128xbf16>
    %cst = arith.constant dense<0.000000e+00> : vector<128x128xf32>
    %2 = tpu.matmul %0, %1, %cst {dimension_numbers = #tpu.dot_dimension_numbers<[1], [0], [0], [1], [0, 0, 1, 1], [], []>} : vector<128x64xbf16>, vector<64x128xbf16>, vector<128x128xf32> -> vector<128x128xf32>
    %3 = arith.truncf %2 : vector<128x128xf32> to vector<128x128xbf16>
    %c0_3 = arith.constant 0 : index
    %c0_4 = arith.constant 0 : index
    %4 = vector.load %arg4[%c0_3, %c0_4] : memref<128x128xbf16, #tpu.memory_space<vmem>>, vector<128x128xbf16>
    tpu.vector_store %arg4[%c0_3, %c0_4], %3 {strides = array<i32>} : memref<128x128xbf16, #tpu.memory_space<vmem>>, vector<128x128xbf16>,
    %5 = vector.shape_cast %2 : vector<128x128xf32> to vector<16x8x128xf32>
    %cst_5 = arith.constant dense<0.000000e+00> : vector<8x128xf32>
    %6 = vector.multi_reduction <add>, %5, %cst_5 [0] : vector<16x8x128xf32> to vector<8x128xf32>
    %c0_6 = arith.constant 0 : index
    %c0_7 = arith.constant 0 : index
    %c0_8 = arith.constant 0 : index
    %7 = vector.load %arg5[%c0_6, %c0_7, %c0_8] : memref<1x8x128xf32, #tpu.memory_space<vmem>>, vector<1x8x128xf32>
    %8 = vector.shape_cast %7 : vector<1x8x128xf32> to vector<8x128xf32>
    %9 = vector.shape_cast %6 : vector<8x128xf32> to vector<1x8x128xf32>
    tpu.vector_store %arg5[%c0_6, %c0_7, %c0_8], %9 {strides = array<i32>} : memref<1x8x128xf32, #tpu.memory_space<vmem>>, vector<1x8x128xf32>,
    %10 = arith.mulf %5, %5 : vector<16x8x128xf32>
    %cst_9 = arith.constant dense<0.000000e+00> : vector<8x128xf32>
    %11 = vector.multi_reduction <add>, %10, %cst_9 [0] : vector<16x8x128xf32> to vector<8x128xf32>
    %c0_10 = arith.constant 0 : index
    %c0_11 = arith.constant 0 : index
    %c0_12 = arith.constant 0 : index
    %12 = vector.load %arg6[%c0_10, %c0_11, %c0_12] : memref<1x8x128xf32, #tpu.memory_space<vmem>>, vector<1x8x128xf32>
    %13 = vector.shape_cast %12 : vector<1x8x128xf32> to vector<8x128xf32>
    %14 = vector.shape_cast %11 : vector<8x128xf32> to vector<1x8x128xf32>
    tpu.vector_store %arg6[%c0_10, %c0_11, %c0_12], %14 {strides = array<i32>} : memref<1x8x128xf32, #tpu.memory_space<vmem>>, vector<1x8x128xf32>,
    return
  }
  func.func @transform_0(%arg0: i32, %arg1: i32) -> (i32, i32) {
    %c0_i32 = arith.constant 0 : i32
    %c0_i32_0 = arith.constant 0 : i32
    return %arg0, %c0_i32 : i32, i32
  }
  func.func @transform_1(%arg0: i32, %arg1: i32) -> (i32, i32) {
    %c0_i32 = arith.constant 0 : i32
    %c0_i32_0 = arith.constant 0 : i32
    return %c0_i32, %arg1 : i32, i32
  }
  func.func @transform_2(%arg0: i32, %arg1: i32) -> (i32, i32) {
    %c0_i32 = arith.constant 0 : i32
    return %arg0, %arg1 : i32, i32
  }
  func.func @transform_3(%arg0: i32, %arg1: i32) -> (i32, i32, i32) {
    %c0_i32 = arith.constant 0 : i32
    %c0_i32_0 = arith.constant 0 : i32
    return %arg0, %c0_i32, %arg1 : i32, i32, i32
  }
  func.func @transform_4(%arg0: i32, %arg1: i32) -> (i32, i32, i32) {
    %c0_i32 = arith.constant 0 : i32
    %c0_i32_0 = arith.constant 0 : i32
    return %arg0, %c0_i32, %arg1 : i32, i32, i32
  }
}

module attributes {stable_mosaic.version = 11 : i64} {
  func.func @_bn_act_kernel(%arg0: i32, %arg1: i32, %arg2: memref<128x128xbf16, #tpu.memory_space<vmem>>, %arg3: memref<1x128xf32, #tpu.memory_space<vmem>>, %arg4: memref<1x128xf32, #tpu.memory_space<vmem>>, %arg5: memref<128x128xf32, #tpu.memory_space<vmem>>) attributes {dimension_semantics = [#tpu.dimension_semantics<parallel>, #tpu.dimension_semantics<parallel>], iteration_bounds = array<i64: 1, 1>, scalar_prefetch = 0 : i64, scratch_operands = 0 : i64, tpu.core_type = #tpu.core_type<tc>, window_params = [{transform_indices = @transform_0, window_bounds = array<i64: 128, 128>}, {transform_indices = @transform_1, window_bounds = array<i64: 1, 128>}, {transform_indices = @transform_2, window_bounds = array<i64: 1, 128>}, {transform_indices = @transform_3, window_bounds = array<i64: 128, 128>}]} {
    %c0 = arith.constant 0 : index
    %c0_0 = arith.constant 0 : index
    %0 = vector.load %arg2[%c0, %c0_0] : memref<128x128xbf16, #tpu.memory_space<vmem>>, vector<128x128xbf16>
    %1 = arith.extf %0 : vector<128x128xbf16> to vector<128x128xf32>
    %c0_1 = arith.constant 0 : index
    %c0_2 = arith.constant 0 : index
    %2 = vector.load %arg3[%c0_1, %c0_2] : memref<1x128xf32, #tpu.memory_space<vmem>>, vector<1x128xf32>
    %3 = vector.broadcast %2 : vector<1x128xf32> to vector<128x128xf32>
    %4 = arith.mulf %1, %3 : vector<128x128xf32>
    %c0_3 = arith.constant 0 : index
    %c0_4 = arith.constant 0 : index
    %5 = vector.load %arg4[%c0_3, %c0_4] : memref<1x128xf32, #tpu.memory_space<vmem>>, vector<1x128xf32>
    %6 = vector.broadcast %5 : vector<1x128xf32> to vector<128x128xf32>
    %7 = arith.addf %4, %6 : vector<128x128xf32>
    %cst = arith.constant 0.000000e+00 : f32
    %8 = vector.broadcast %cst : f32 to vector<128x128xf32>
    %9 = arith.cmpf ogt, %7, %8 : vector<128x128xf32>
    %cst_5 = arith.constant 2.000000e-01 : f32
    %10 = vector.broadcast %cst_5 : f32 to vector<128x128xf32>
    %11 = arith.mulf %10, %7 : vector<128x128xf32>
    %12 = arith.select %9, %7, %11 : vector<128x128xi1>, vector<128x128xf32>
    %c0_6 = arith.constant 0 : index
    %c0_7 = arith.constant 0 : index
    %13 = vector.load %arg5[%c0_6, %c0_7] : memref<128x128xf32, #tpu.memory_space<vmem>>, vector<128x128xf32>
    tpu.vector_store %arg5[%c0_6, %c0_7], %12 {strides = array<i32>} : memref<128x128xf32, #tpu.memory_space<vmem>>, vector<128x128xf32>,
    return
  }
  func.func @transform_0(%arg0: i32, %arg1: i32) -> (i32, i32) {
    %c0_i32 = arith.constant 0 : i32
    return %arg0, %arg1 : i32, i32
  }
  func.func @transform_1(%arg0: i32, %arg1: i32) -> (i32, i32) {
    %c0_i32 = arith.constant 0 : i32
    %c0_i32_0 = arith.constant 0 : i32
    return %c0_i32, %arg1 : i32, i32
  }
  func.func @transform_2(%arg0: i32, %arg1: i32) -> (i32, i32) {
    %c0_i32 = arith.constant 0 : i32
    %c0_i32_0 = arith.constant 0 : i32
    return %c0_i32, %arg1 : i32, i32
  }
  func.func @transform_3(%arg0: i32, %arg1: i32) -> (i32, i32) {
    %c0_i32 = arith.constant 0 : i32
    return %arg0, %arg1 : i32, i32
  }
}

</mosaic_0001>

<llo_original>
// kernel: discriminator_block.2
$region0: #{discriminator_block.2}
  #allocation0 [shape = 'u32[]', space=smem, size = 0x4, offset = 0x4, fixed_abs, tag = 'smem constant byte address 0x4 - core index']
  #allocation1 [shape = 'u32[72,128]{1,0:T(1,128)}', space=vmem, size = 0x9000, scoped, tag = 'internal scratch']
  %s0 = inlined_call_operand.vmem [shape: bf16[128,64], index: 0, kind: input, shape index: {}]
  %s1 = inlined_call_operand.vmem [shape: bf16[64,128], index: 1, kind: input, shape index: {}]
  %s2 = inlined_call_operand.vmem [shape: bf16[128,128], index: 2, kind: output, shape index: {0}]
  %s3 = inlined_call_operand.vmem [shape: f32[1,8,128], index: 3, kind: output, shape index: {1}]
  %s4 = inlined_call_operand.vmem [shape: f32[1,8,128], index: 4, kind: output, shape index: {2}]
  %5 = xla_tuple %s2, %s3, %s4
  %s6 = sld [smem:[#allocation0]]
  $region34: #{discriminator_block.2} parent=0
    _
  %s8 = ssub.s32 1, %s6
  %s9 = scalar_select 0, %s8, %s6
  // Predicated region
  $region2: #{discriminator_block.2} parent=0 // pred_check
    _
  $region3: #{discriminator_block.2} parent=0 // pred_check_branch
    %11 = sbr.rel (0) target = $region5
  $region4: #{discriminator_block.2} parent=0 // pred_region
    _
  $region5: #{discriminator_block.2} parent=0 // pred_fallthru
    _
  // Predicated region
  $region6: #{discriminator_block.2} parent=0 // pred_check
    _
  $region7: #{discriminator_block.2} parent=0 // pred_check_branch
    %13 = sbr.rel (0) target = $region9
  $region8: #{discriminator_block.2} parent=0 // pred_region
    _
  $region9: #{discriminator_block.2} parent=0 // pred_fallthru
    _
  %v15 = vld [vmem:[%s0] sm:$0xf]
  %v16 = vld [vmem:[%s0 + $0x4] sm:$0xf]
  %v17 = vld [vmem:[%s0 + $0x8] sm:$0xf]
  %v18 = vld [vmem:[%s0 + $0xc] sm:$0xf]
  %v19 = vld [vmem:[%s0 + $0x10] sm:$0xf]
  %v20 = vld [vmem:[%s0 + $0x14] sm:$0xf]
  %v21 = vld [vmem:[%s0 + $0x18] sm:$0xf]
  %v22 = vld [vmem:[%s0 + $0x1c] sm:$0xf]
  %v23 = vld [vmem:[%s0 + $0x20] sm:$0xf]
  %v24 = vld [vmem:[%s0 + $0x24] sm:$0xf]
  %v25 = vld [vmem:[%s0 + $0x28] sm:$0xf]
  %v26 = vld [vmem:[%s0 + $0x2c] sm:$0xf]
  %v27 = vld [vmem:[%s0 + $0x30] sm:$0xf]
  %v28 = vld [vmem:[%s0 + $0x34] sm:$0xf]
  %v29 = vld [vmem:[%s0 + $0x38] sm:$0xf]
  %v30 = vld [vmem:[%s0 + $0x3c] sm:$0xf]
  %v31 = vld [vmem:[%s1] sm:$0xf]
  %v32 = vld [vmem:[%s1 + $0x4] sm:$0xf]
  %v33 = vld [vmem:[%s1 + $0x8] sm:$0xf]
  %v34 = vld [vmem:[%s1 + $0xc] sm:$0xf]
  %v35 = vld [vmem:[%s1 + $0x10] sm:$0xf]
  %v36 = vld [vmem:[%s1 + $0x14] sm:$0xf]
  %v37 = vld [vmem:[%s1 + $0x18] sm:$0xf]
  %v38 = vld [vmem:[%s1 + $0x1c] sm:$0xf]
  %v55 = vunpack.c.l.b16 %v15
  %v56 = vunpack.c.l.b16 %v16
  %v57 = vunpack.c.l.b16 %v17
  %v58 = vunpack.c.l.b16 %v18
  %v59 = vunpack.c.l.b16 %v19
  %v60 = vunpack.c.l.b16 %v20
  %v61 = vunpack.c.l.b16 %v21
  %v62 = vunpack.c.l.b16 %v22
  %v63 = vunpack.c.l.b16 %v23
  %v64 = vunpack.c.l.b16 %v24
  %v65 = vunpack.c.l.b16 %v25
  %v66 = vunpack.c.l.b16 %v26
  %v67 = vunpack.c.l.b16 %v27
  %v68 = vunpack.c.l.b16 %v28
  %v69 = vunpack.c.l.b16 %v29
  %v70 = vunpack.c.l.b16 %v30
  %v71 = vpack.c.b16 %v56, %v55
  %v72 = vpack.c.b16 %v58, %v57
  %v73 = vpack.c.b16 %v60, %v59
  %v74 = vpack.c.b16 %v62, %v61
  %v75 = vpack.c.b16 %v64, %v63
  %v76 = vpack.c.b16 %v66, %v65
  %v77 = vpack.c.b16 %v68, %v67
  %v78 = vpack.c.b16 %v70, %v69
  %v87 = vunpack.c.l.b16 %v31
  %v88 = vunpack.c.l.b16 %v32
  %v89 = vunpack.c.l.b16 %v33
  %v90 = vunpack.c.l.b16 %v34
  %v91 = vunpack.c.l.b16 %v35
  %v92 = vunpack.c.l.b16 %v36
  %v93 = vunpack.c.l.b16 %v37
  %v94 = vunpack.c.l.b16 %v38
  %v95 = vpack.c.b16 %v88, %v87
  %v96 = vpack.c.b16 %v90, %v89
  %v97 = vpack.c.b16 %v92, %v91
  %v98 = vpack.c.b16 %v94, %v93
  %vm103 = vcmask 523264
  %v105 = vsel %vm103, %v71, 0
  %v108 = vsel %vm103, %v72, 0
  %v111 = vsel %vm103, %v73, 0
  %v114 = vsel %vm103, %v74, 0
  %v117 = vsel %vm103, %v75, 0
  %v120 = vsel %vm103, %v76, 0
  %v123 = vsel %vm103, %v77, 0
  %v126 = vsel %vm103, %v78, 0
  %128 = vmatpush.bf16.msra.mxu0 0
  %129 = vmatpush.bf16.msra.mxu0 0
  %130 = vmatpush.bf16.msra.mxu0 0
  %131 = vmatpush.bf16.msra.mxu0 0
  %132 = vmatpush.bf16.msra.mxu0 %v98
  %133 = vmatpush.bf16.msra.mxu0 %v97
  %134 = vmatpush.bf16.msra.mxu0 %v96
  %135 = vmatpush.bf16.msra.mxu0 %v95
  %136 = vmatmul.bf16.gmra.mxu0 %v105
  %v137 = vpop.f32.mrf.mxu0
  %v138 = vadd.f32 0.0, %v137
  %v139 = vpop.f32.mrf.mxu0
  %v140 = vadd.f32 0.0, %v139
  %141 = vmatmul.bf16.gmra.mxu0 %v108
  %v142 = vpop.f32.mrf.mxu0
  %v143 = vadd.f32 0.0, %v142
  %v144 = vpop.f32.mrf.mxu0
  %v145 = vadd.f32 0.0, %v144
  %146 = vmatmul.bf16.gmra.mxu0 %v111
  %v147 = vpop.f32.mrf.mxu0
  %v148 = vadd.f32 0.0, %v147
  %v149 = vpop.f32.mrf.mxu0
  %v150 = vadd.f32 0.0, %v149
  %151 = vmatmul.bf16.gmra.mxu0 %v114
  %v152 = vpop.f32.mrf.mxu0
  %v153 = vadd.f32 0.0, %v152
  %v154 = vpop.f32.mrf.mxu0
  %v155 = vadd.f32 0.0, %v154
  %156 = vmatmul.bf16.gmra.mxu0 %v117
  %v157 = vpop.f32.mrf.mxu0
  %v158 = vadd.f32 0.0, %v157
  %v159 = vpop.f32.mrf.mxu0
  %v160 = vadd.f32 0.0, %v159
  %161 = vmatmul.bf16.gmra.mxu0 %v120
  %v162 = vpop.f32.mrf.mxu0
  %v163 = vadd.f32 0.0, %v162
  %v164 = vpop.f32.mrf.mxu0
  %v165 = vadd.f32 0.0, %v164
  %166 = vmatmul.bf16.gmra.mxu0 %v123
  %v167 = vpop.f32.mrf.mxu0
  %v168 = vadd.f32 0.0, %v167
  %v169 = vpop.f32.mrf.mxu0
  %v170 = vadd.f32 0.0, %v169
  %171 = vmatmul.bf16.gmra.mxu0 %v126
  %v172 = vpop.f32.mrf.mxu0
  %v173 = vadd.f32 0.0, %v172
  %v174 = vpop.f32.mrf.mxu0
  %v175 = vadd.f32 0.0, %v174
  %176 = vdwg.mxu0
  %v177 = vpack.c.bf16 %v138, %v138
  %v178 = vpack.c.bf16 %v140, %v140
  %v179 = vpack.c.bf16 %v143, %v143
  %v180 = vpack.c.bf16 %v145, %v145
  %v181 = vpack.c.bf16 %v148, %v148
  %v182 = vpack.c.bf16 %v150, %v150
  %v183 = vpack.c.bf16 %v153, %v153
  %v184 = vpack.c.bf16 %v155, %v155
  %v185 = vpack.c.bf16 %v158, %v158
  %v186 = vpack.c.bf16 %v160, %v160
  %v187 = vpack.c.bf16 %v163, %v163
  %v188 = vpack.c.bf16 %v165, %v165
  %v189 = vpack.c.bf16 %v168, %v168
  %v190 = vpack.c.bf16 %v170, %v170
  %v191 = vpack.c.bf16 %v173, %v173
  %v192 = vpack.c.bf16 %v175, %v175
  %193 = vst [vmem:[%s2] sm:$0xf] %v177
  %194 = vst [vmem:[%s2 + $0x4] sm:$0xf] %v178
  %195 = vst [vmem:[%s2 + $0x8] sm:$0xf] %v179
  %196 = vst [vmem:[%s2 + $0xc] sm:$0xf] %v180
  %197 = vst [vmem:[%s2 + $0x10] sm:$0xf] %v181
  %198 = vst [vmem:[%s2 + $0x14] sm:$0xf] %v182
  %199 = vst [vmem:[%s2 + $0x18] sm:$0xf] %v183
  %200 = vst [vmem:[%s2 + $0x1c] sm:$0xf] %v184
  %201 = vst [vmem:[%s2 + $0x20] sm:$0xf] %v185
  %202 = vst [vmem:[%s2 + $0x24] sm:$0xf] %v186
  %203 = vst [vmem:[%s2 + $0x28] sm:$0xf] %v187
  %204 = vst [vmem:[%s2 + $0x2c] sm:$0xf] %v188
  %205 = vst [vmem:[%s2 + $0x30] sm:$0xf] %v189
  %206 = vst [vmem:[%s2 + $0x34] sm:$0xf] %v190
  %207 = vst [vmem:[%s2 + $0x38] sm:$0xf] %v191
  %208 = vst [vmem:[%s2 + $0x3c] sm:$0xf] %v192
  %v209 = vadd.f32 %v138, %v140
  %v210 = vadd.f32 %v209, %v143
  %v211 = vadd.f32 %v210, %v145
  %v212 = vadd.f32 %v211, %v148
  %v213 = vadd.f32 %v212, %v150
  %v214 = vadd.f32 %v213, %v153
  %v215 = vadd.f32 %v214, %v155
  %v216 = vadd.f32 %v215, %v158
  %v217 = vadd.f32 %v216, %v160
  %v218 = vadd.f32 %v217, %v163
  %v219 = vadd.f32 %v218, %v165
  %v220 = vadd.f32 %v219, %v168
  %v221 = vadd.f32 %v220, %v170
  %v222 = vadd.f32 %v221, %v173
  %v223 = vadd.f32 %v222, %v175
  %224 = vst [vmem:[%s3] sm:$0xff] %v223
  %v225 = vmul.f32 %v138, %v138
  %v226 = vmul.f32 %v140, %v140
  %v227 = vmul.f32 %v143, %v143
  %v228 = vmul.f32 %v145, %v145
  %v229 = vmul.f32 %v148, %v148
  %v230 = vmul.f32 %v150, %v150
  %v231 = vmul.f32 %v153, %v153
  %v232 = vmul.f32 %v155, %v155
  %v233 = vmul.f32 %v158, %v158
  %v234 = vmul.f32 %v160, %v160
  %v235 = vmul.f32 %v163, %v163
  %v236 = vmul.f32 %v165, %v165
  %v237 = vmul.f32 %v168, %v168
  %v238 = vmul.f32 %v170, %v170
  %v239 = vmul.f32 %v173, %v173
  %v240 = vmul.f32 %v175, %v175
  %v241 = vadd.f32 %v225, %v226
  %v242 = vadd.f32 %v241, %v227
  %v243 = vadd.f32 %v242, %v228
  %v244 = vadd.f32 %v243, %v229
  %v245 = vadd.f32 %v244, %v230
  %v246 = vadd.f32 %v245, %v231
  %v247 = vadd.f32 %v246, %v232
  %v248 = vadd.f32 %v247, %v233
  %v249 = vadd.f32 %v248, %v234
  %v250 = vadd.f32 %v249, %v235
  %v251 = vadd.f32 %v250, %v236
  %v252 = vadd.f32 %v251, %v237
  %v253 = vadd.f32 %v252, %v238
  %v254 = vadd.f32 %v253, %v239
  %v255 = vadd.f32 %v254, %v240
  %256 = vst [vmem:[%s4] sm:$0xff] %v255
  // Predicated region
  $region10: #{discriminator_block.2} parent=0 // pred_check
    _
  $region11: #{discriminator_block.2} parent=0 // pred_check_branch
    %258 = sbr.rel (0) target = $region13
  $region12: #{discriminator_block.2} parent=0 // pred_region
    _
  $region13: #{discriminator_block.2} parent=0 // pred_fallthru
    _
  // Predicated region
  $region14: #{discriminator_block.2} parent=0 // pred_check
    _
  $region15: #{discriminator_block.2} parent=0 // pred_check_branch
    %260 = sbr.rel (0) target = $region17
  $region16: #{discriminator_block.2} parent=0 // pred_region
    _
  $region17: #{discriminator_block.2} parent=0 // pred_fallthru
    _
  // Predicated region
  $region18: #{discriminator_block.2} parent=0 // pred_check
    _
  $region19: #{discriminator_block.2} parent=0 // pred_check_branch
    %262 = sbr.rel (0) target = $region21
  $region20: #{discriminator_block.2} parent=0 // pred_region
    _
  $region21: #{discriminator_block.2} parent=0 // pred_fallthru
    _
  // Predicated region
  $region22: #{discriminator_block.2} parent=0 // pred_check
    _
  $region23: #{discriminator_block.2} parent=0 // pred_check_branch
    %264 = sbr.rel (0) target = $region25
  $region24: #{discriminator_block.2} parent=0 // pred_region
    _
  $region25: #{discriminator_block.2} parent=0 // pred_fallthru
    _
  // Predicated region
  $region26: #{discriminator_block.2} parent=0 // pred_check
    _
  $region27: #{discriminator_block.2} parent=0 // pred_check_branch
    %266 = sbr.rel (0) target = $region29
  $region28: #{discriminator_block.2} parent=0 // pred_region
    _
  $region29: #{discriminator_block.2} parent=0 // pred_fallthru
    _
  // Predicated region
  $region30: #{discriminator_block.2} parent=0 // pred_check
    _
  $region31: #{discriminator_block.2} parent=0 // pred_check_branch
    %268 = sbr.rel (0) target = $region33
  $region32: #{discriminator_block.2} parent=0 // pred_region
    _
  $region33: #{discriminator_block.2} parent=0 // pred_fallthru
    _

// kernel: discriminator_block.3
$region0: #{discriminator_block.3}
  #allocation0 [shape = 'u32[]', space=smem, size = 0x4, offset = 0x4, fixed_abs, tag = 'smem constant byte address 0x4 - core index']
  #allocation1 [shape = 'u32[72,128]{1,0:T(1,128)}', space=vmem, size = 0x9000, scoped, tag = 'internal scratch']
  %s0 = inlined_call_operand.vmem [shape: bf16[128,128], index: 0, kind: input, shape index: {}]
  %s1 = inlined_call_operand.vmem [shape: f32[1,128], index: 1, kind: input, shape index: {}]
  %s2 = inlined_call_operand.vmem [shape: f32[1,128], index: 2, kind: input, shape index: {}]
  %s3 = inlined_call_operand.vmem [shape: f32[128,128], index: 3, kind: output, shape index: {}]
  %s4 = sld [smem:[#allocation0]]
  $region22: #{discriminator_block.3} parent=0
    _
  %s6 = ssub.s32 1, %s4
  %s7 = scalar_select 0, %s6, %s4
  // Predicated region
  $region2: #{discriminator_block.3} parent=0 // pred_check
    _
  $region3: #{discriminator_block.3} parent=0 // pred_check_branch
    %9 = sbr.rel (0) target = $region5
  $region4: #{discriminator_block.3} parent=0 // pred_region
    _
  $region5: #{discriminator_block.3} parent=0 // pred_fallthru
    _
  // Predicated region
  $region6: #{discriminator_block.3} parent=0 // pred_check
    _
  $region7: #{discriminator_block.3} parent=0 // pred_check_branch
    %11 = sbr.rel (0) target = $region9
  $region8: #{discriminator_block.3} parent=0 // pred_region
    _
  $region9: #{discriminator_block.3} parent=0 // pred_fallthru
    _
  // Predicated region
  $region10: #{discriminator_block.3} parent=0 // pred_check
    _
  $region11: #{discriminator_block.3} parent=0 // pred_check_branch
    %13 = sbr.rel (0) target = $region13
  $region12: #{discriminator_block.3} parent=0 // pred_region
    _
  $region13: #{discriminator_block.3} parent=0 // pred_fallthru
    _
  %v14 = vld [vmem:[%s0] sm:$0xf]
  %v15 = vld [vmem:[%s0 + $0x4] sm:$0xf]
  %v16 = vld [vmem:[%s0 + $0x8] sm:$0xf]
  %v17 = vld [vmem:[%s0 + $0xc] sm:$0xf]
  %v18 = vld [vmem:[%s0 + $0x10] sm:$0xf]
  %v19 = vld [vmem:[%s0 + $0x14] sm:$0xf]
  %v20 = vld [vmem:[%s0 + $0x18] sm:$0xf]
  %v21 = vld [vmem:[%s0 + $0x1c] sm:$0xf]
  %v22 = vld [vmem:[%s0 + $0x20] sm:$0xf]
  %v23 = vld [vmem:[%s0 + $0x24] sm:$0xf]
  %v24 = vld [vmem:[%s0 + $0x28] sm:$0xf]
  %v25 = vld [vmem:[%s0 + $0x2c] sm:$0xf]
  %v26 = vld [vmem:[%s0 + $0x30] sm:$0xf]
  %v27 = vld [vmem:[%s0 + $0x34] sm:$0xf]
  %v28 = vld [vmem:[%s0 + $0x38] sm:$0xf]
  %v29 = vld [vmem:[%s0 + $0x3c] sm:$0xf]
  %v30 = vunpack.c.l.bf16 %v14
  %v31 = vunpack.c.l.bf16 %v15
  %v32 = vunpack.c.l.bf16 %v16
  %v33 = vunpack.c.l.bf16 %v17
  %v34 = vunpack.c.l.bf16 %v18
  %v35 = vunpack.c.l.bf16 %v19
  %v36 = vunpack.c.l.bf16 %v20
  %v37 = vunpack.c.l.bf16 %v21
  %v38 = vunpack.c.l.bf16 %v22
  %v39 = vunpack.c.l.bf16 %v23
  %v40 = vunpack.c.l.bf16 %v24
  %v41 = vunpack.c.l.bf16 %v25
  %v42 = vunpack.c.l.bf16 %v26
  %v43 = vunpack.c.l.bf16 %v27
  %v44 = vunpack.c.l.bf16 %v28
  %v45 = vunpack.c.l.bf16 %v29
  %v46 = vld [vmem:[%s1] sm:$0x1]
  %v48 = vperm.slane %v46, 0
  %v50 = vmul.f32 %v30, %v48
  %v51 = vmul.f32 %v31, %v48
  %v52 = vmul.f32 %v32, %v48
  %v53 = vmul.f32 %v33, %v48
  %v54 = vmul.f32 %v34, %v48
  %v55 = vmul.f32 %v35, %v48
  %v56 = vmul.f32 %v36, %v48
  %v57 = vmul.f32 %v37, %v48
  %v58 = vmul.f32 %v38, %v48
  %v59 = vmul.f32 %v39, %v48
  %v60 = vmul.f32 %v40, %v48
  %v61 = vmul.f32 %v41, %v48
  %v62 = vmul.f32 %v42, %v48
  %v63 = vmul.f32 %v43, %v48
  %v64 = vmul.f32 %v44, %v48
  %v65 = vmul.f32 %v45, %v48
  %v66 = vld [vmem:[%s2] sm:$0x1]
  %v68 = vperm.slane %v66, 0
  %v70 = vadd.f32 %v50, %v68
  %v71 = vadd.f32 %v51, %v68
  %v72 = vadd.f32 %v52, %v68
  %v73 = vadd.f32 %v53, %v68
  %v74 = vadd.f32 %v54, %v68
  %v75 = vadd.f32 %v55, %v68
  %v76 = vadd.f32 %v56, %v68
  %v77 = vadd.f32 %v57, %v68
  %v78 = vadd.f32 %v58, %v68
  %v79 = vadd.f32 %v59, %v68
  %v80 = vadd.f32 %v60, %v68
  %v81 = vadd.f32 %v61, %v68
  %v82 = vadd.f32 %v62, %v68
  %v83 = vadd.f32 %v63, %v68
  %v84 = vadd.f32 %v64, %v68
  %v85 = vadd.f32 %v65, %v68
  %vm86 = vcmp.gt.f32.partialorder %v70, 0.0
  %vm87 = vcmp.gt.f32.partialorder %v71, 0.0
  %vm88 = vcmp.gt.f32.partialorder %v72, 0.0
  %vm89 = vcmp.gt.f32.partialorder %v73, 0.0
  %vm90 = vcmp.gt.f32.partialorder %v74, 0.0
  %vm91 = vcmp.gt.f32.partialorder %v75, 0.0
  %vm92 = vcmp.gt.f32.partialorder %v76, 0.0
  %vm93 = vcmp.gt.f32.partialorder %v77, 0.0
  %vm94 = vcmp.gt.f32.partialorder %v78, 0.0
  %vm95 = vcmp.gt.f32.partialorder %v79, 0.0
  %vm96 = vcmp.gt.f32.partialorder %v80, 0.0
  %vm97 = vcmp.gt.f32.partialorder %v81, 0.0
  %vm98 = vcmp.gt.f32.partialorder %v82, 0.0
  %vm99 = vcmp.gt.f32.partialorder %v83, 0.0
  %vm100 = vcmp.gt.f32.partialorder %v84, 0.0
  %vm101 = vcmp.gt.f32.partialorder %v85, 0.0
  %v102 = vmul.f32 %v70, 0.2
  %v103 = vmul.f32 %v71, 0.2
  %v104 = vmul.f32 %v72, 0.2
  %v105 = vmul.f32 %v73, 0.2
  %v106 = vmul.f32 %v74, 0.2
  %v107 = vmul.f32 %v75, 0.2
  %v108 = vmul.f32 %v76, 0.2
  %v109 = vmul.f32 %v77, 0.2
  %v110 = vmul.f32 %v78, 0.2
  %v111 = vmul.f32 %v79, 0.2
  %v112 = vmul.f32 %v80, 0.2
  %v113 = vmul.f32 %v81, 0.2
  %v114 = vmul.f32 %v82, 0.2
  %v115 = vmul.f32 %v83, 0.2
  %v116 = vmul.f32 %v84, 0.2
  %v117 = vmul.f32 %v85, 0.2
  %v118 = vsel %vm86, %v70, %v102
  %v119 = vsel %vm87, %v71, %v103
  %v120 = vsel %vm88, %v72, %v104
  %v121 = vsel %vm89, %v73, %v105
  %v122 = vsel %vm90, %v74, %v106
  %v123 = vsel %vm91, %v75, %v107
  %v124 = vsel %vm92, %v76, %v108
  %v125 = vsel %vm93, %v77, %v109
  %v126 = vsel %vm94, %v78, %v110
  %v127 = vsel %vm95, %v79, %v111
  %v128 = vsel %vm96, %v80, %v112
  %v129 = vsel %vm97, %v81, %v113
  %v130 = vsel %vm98, %v82, %v114
  %v131 = vsel %vm99, %v83, %v115
  %v132 = vsel %vm100, %v84, %v116
  %v133 = vsel %vm101, %v85, %v117
  %134 = vst [vmem:[%s3] sm:$0xff] %v118
  %135 = vst [vmem:[%s3 + $0x8] sm:$0xff] %v119
  %136 = vst [vmem:[%s3 + $0x10] sm:$0xff] %v120
  %137 = vst [vmem:[%s3 + $0x18] sm:$0xff] %v121
  %138 = vst [vmem:[%s3 + $0x20] sm:$0xff] %v122
  %139 = vst [vmem:[%s3 + $0x28] sm:$0xff] %v123
  %140 = vst [vmem:[%s3 + $0x30] sm:$0xff] %v124
  %141 = vst [vmem:[%s3 + $0x38] sm:$0xff] %v125
  %142 = vst [vmem:[%s3 + $0x40] sm:$0xff] %v126
  %143 = vst [vmem:[%s3 + $0x48] sm:$0xff] %v127
  %144 = vst [vmem:[%s3 + $0x50] sm:$0xff] %v128
  %145 = vst [vmem:[%s3 + $0x58] sm:$0xff] %v129
  %146 = vst [vmem:[%s3 + $0x60] sm:$0xff] %v130
  %147 = vst [vmem:[%s3 + $0x68] sm:$0xff] %v131
  %148 = vst [vmem:[%s3 + $0x70] sm:$0xff] %v132
  %149 = vst [vmem:[%s3 + $0x78] sm:$0xff] %v133
  // Predicated region
  $region14: #{discriminator_block.3} parent=0 // pred_check
    _
  $region15: #{discriminator_block.3} parent=0 // pred_check_branch
    %151 = sbr.rel (0) target = $region17
  $region16: #{discriminator_block.3} parent=0 // pred_region
    _
  $region17: #{discriminator_block.3} parent=0 // pred_fallthru
    _
  // Predicated region
  $region18: #{discriminator_block.3} parent=0 // pred_check
    _
  $region19: #{discriminator_block.3} parent=0 // pred_check_branch
    %153 = sbr.rel (0) target = $region21
  $region20: #{discriminator_block.3} parent=0 // pred_region
    _
  $region21: #{discriminator_block.3} parent=0 // pred_fallthru
    _

</llo_original>
